<compile_context>
chip_gen: v5e
topology: v5e:2x2
jax: 0.10.0
libtpu: 0.0.40
codegen_flags: <defaults>
</compile_context>

<pallas_src>
import functools

import jax
import jax.numpy as jnp
from jax.experimental import pallas as pl
from jax.experimental.pallas import tpu as pltpu


def _round_up(x, m):
    return (x + m - 1) // m * m


def _fused_dnn_kernel(*refs):
    """Fused [Linear -> bias -> ReLU] * L for one batch tile.

    refs = (x_ref, w0_ref, b0_ref, ..., w{L-1}_ref, b{L-1}_ref, o_ref).
    All intermediate activations live in vregs/VMEM; only the final layer's
    activations are written back to HBM.
    """
    x_ref, o_ref = refs[0], refs[-1]
    layer_refs = refs[1:-1]
    n_layers = len(layer_refs) // 2

    h = x_ref[...]
    for i in range(n_layers):
        w = layer_refs[2 * i][...]
        b = layer_refs[2 * i + 1][...]          # (1, N) broadcasts over batch rows
        acc = jnp.dot(h, w, preferred_element_type=jnp.float32)
        h = jnp.maximum(acc + b, 0.0)           # f32 epilogue, ReLU after every layer
    o_ref[...] = h.astype(o_ref.dtype)


def _fused_dnn_call(x_pad, padded_params, *, tb):
    """Single pallas_call over padded, lane-dense arrays."""
    batch_p, d0 = x_pad.shape
    grid = (batch_p // tb,)

    in_specs = [pl.BlockSpec((tb, d0), lambda i: (i, 0))]
    flat_args = []
    flops = 0
    bytes_accessed = x_pad.size * 4
    for (w, b) in padded_params:
        k, n = w.shape
        # Full-array blocks, same block index every grid step -> weights stay
        # resident in VMEM across batch tiles.
        in_specs.append(pl.BlockSpec((k, n), lambda i: (0, 0)))
        in_specs.append(pl.BlockSpec((1, n), lambda i: (0, 0)))
        flat_args.extend([w, b])
        flops += 2 * batch_p * k * n
        bytes_accessed += (w.size + b.size) * 4
    d_out = padded_params[-1][0].shape[1]
    bytes_accessed += batch_p * d_out * 4

    # TODO(synk): if hidden layers ever grow too wide for a whole (K, N) weight
    # block to fit VMEM (esp. v7x's 64 MiB), add a K reduction grid axis with an
    # f32 VMEM accumulator + pl.when init/finalize instead of full-array blocks.
    return pl.pallas_call(
        _fused_dnn_kernel,
        out_shape=jax.ShapeDtypeStruct((batch_p, d_out), x_pad.dtype),
        grid=grid,
        in_specs=in_specs,
        out_specs=pl.BlockSpec((tb, d_out), lambda i: (i, 0)),
        compiler_params=pltpu.CompilerParams(
            dimension_semantics=("parallel",)),   # megacore-shard batch tiles on v7x
        cost_estimate=pl.CostEstimate(
            flops=flops, transcendentals=0, bytes_accessed=bytes_accessed),
    )(x_pad, *flat_args)


def init_dnn_params(key, inputs_dim, hidden_units, init_std=1e-4):
    """Mirror DNN.__init__: weights ~ N(0, init_std); biases PyTorch-Linear-style
    uniform(-1/sqrt(fan_in), 1/sqrt(fan_in)).

    Returns (params, padded_params):
      params        : unpadded (w:(in,out), b:(out,)) pairs, for reference math.
      padded_params : zero-padded to 128-multiples, bias stored as (1, N_pad),
                      ready for the fused kernel (padding done once, at init).
    """
    dims = [inputs_dim] + list(hidden_units)
    params, padded = [], []
    for i in range(len(dims) - 1):
        key, kw, kb = jax.random.split(key, 3)
        fan_in, fan_out = dims[i], dims[i + 1]
        # stored as (in_dim, out_dim) == transpose of nn.Linear.weight
        w = init_std * jax.random.normal(kw, (fan_in, fan_out), dtype=jnp.float32)
        bound = 1.0 / jnp.sqrt(fan_in)
        b = jax.random.uniform(kb, (fan_out,), minval=-bound, maxval=bound,
                               dtype=jnp.float32)
        params.append((w, b))

        k_pad, n_pad = _round_up(fan_in, 128), _round_up(fan_out, 128)
        w_pad = jnp.zeros((k_pad, n_pad), jnp.float32).at[:fan_in, :fan_out].set(w)
        b_pad = jnp.zeros((1, n_pad), jnp.float32).at[0, :fan_out].set(b)
        padded.append((w_pad, b_pad))
    return params, padded


@functools.partial(jax.jit, static_argnames=("out_dim", "max_tb"))
def dnn_forward(x, padded_params, *, out_dim, max_tb=256):
    """Forward pass of DNN: [Linear -> ReLU] * L, fully fused in one kernel.

    use_bn=False and dropout_rate=0 in the reference config, so both are identity.
    """
    # TODO(synk): BatchNorm1d (use_bn=True), Dropout (rate>0, training mode) and
    # non-ReLU activations (sigmoid/prelu/Dice) are not implemented.
    # TODO(synk): on v6e/v7x a bf16 cast of x/W (keeping f32 accumulation) would
    # double MXU throughput, but with init_std=1e-4 it risks the 1e-5 tolerance,
    # so f32 is kept here.
    batch, in_dim = x.shape
    d0_pad = padded_params[0][0].shape[0]
    out_pad_dim = padded_params[-1][0].shape[1]
    assert in_dim <= d0_pad and out_dim <= out_pad_dim

    # Batch tile: multiple of 8 sublanes, as large as max_tb allows.
    tb = min(max_tb, _round_up(batch, 8))
    batch_p = _round_up(batch, tb)

    # Zero-pad activations once (padding rows/cols stay zero through all layers).
    x_pad = jnp.zeros((batch_p, d0_pad), x.dtype).at[:batch, :in_dim].set(x)

    out_pad = _fused_dnn_call(x_pad, padded_params, tb=tb)
    return out_pad[:batch, :out_dim]


if __name__ == "__main__":
    key = jax.random.PRNGKey(0)
    batch, inputs_dim = 8, 32
    hidden_units = (64, 32)

    key, kx = jax.random.split(key)
    x = jax.random.normal(kx, (batch, inputs_dim), dtype=jnp.float32)

    params, padded_params = init_dnn_params(key, inputs_dim, hidden_units)

    out = dnn_forward(x, padded_params, out_dim=hidden_units[-1])
    out = jax.block_until_ready(out)

    # sanity check against plain-JAX reference (unpadded params)
    ref = x
    for (w, b) in params:
        ref = jnp.maximum(ref @ w + b, 0.0)
    assert out.shape == (batch, hidden_units[-1])
    assert jnp.allclose(out, ref, atol=1e-5, rtol=1e-5)

    print("KERNEL_OK")
</pallas_src>

<mosaic_0001>
module attributes {stable_mosaic.version = 11 : i64} {
  func.func @_fused_dnn_kernel(%arg0: i32, %arg1: memref<8x128xf32, #tpu.memory_space<vmem>>, %arg2: memref<128x128xf32, #tpu.memory_space<vmem>>, %arg3: memref<1x128xf32, #tpu.memory_space<vmem>>, %arg4: memref<128x128xf32, #tpu.memory_space<vmem>>, %arg5: memref<1x128xf32, #tpu.memory_space<vmem>>, %arg6: memref<8x128xf32, #tpu.memory_space<vmem>>) attributes {dimension_semantics = [#tpu.dimension_semantics<parallel>], iteration_bounds = array<i64: 1>, scalar_prefetch = 0 : i64, scratch_operands = 0 : i64, tpu.core_type = #tpu.core_type<tc>, window_params = [{transform_indices = @transform_0, window_bounds = array<i64: 8, 128>}, {pipeline_mode = #tpu.pipeline_mode<synchronous>, transform_indices = @transform_1, window_bounds = array<i64: 128, 128>}, {pipeline_mode = #tpu.pipeline_mode<synchronous>, transform_indices = @transform_2, window_bounds = array<i64: 1, 128>}, {pipeline_mode = #tpu.pipeline_mode<synchronous>, transform_indices = @transform_3, window_bounds = array<i64: 128, 128>}, {pipeline_mode = #tpu.pipeline_mode<synchronous>, transform_indices = @transform_4, window_bounds = array<i64: 1, 128>}, {transform_indices = @transform_5, window_bounds = array<i64: 8, 128>}]} {
    %c0 = arith.constant 0 : index
    %c0_0 = arith.constant 0 : index
    %0 = vector.load %arg1[%c0, %c0_0] : memref<8x128xf32, #tpu.memory_space<vmem>>, vector<8x128xf32>
    %c0_1 = arith.constant 0 : index
    %c0_2 = arith.constant 0 : index
    %1 = vector.load %arg2[%c0_1, %c0_2] : memref<128x128xf32, #tpu.memory_space<vmem>>, vector<128x128xf32>
    %c0_3 = arith.constant 0 : index
    %c0_4 = arith.constant 0 : index
    %2 = vector.load %arg3[%c0_3, %c0_4] : memref<1x128xf32, #tpu.memory_space<vmem>>, vector<1x128xf32>
    %cst = arith.constant dense<0.000000e+00> : vector<8x128xf32>
    %3 = tpu.matmul %0, %1, %cst {dimension_numbers = #tpu.dot_dimension_numbers<[1], [0], [0], [1], [0, 0, 1, 1], [], []>} : vector<8x128xf32>, vector<128x128xf32>, vector<8x128xf32> -> vector<8x128xf32>
    %4 = vector.broadcast %2 : vector<1x128xf32> to vector<8x128xf32>
    %5 = arith.addf %3, %4 : vector<8x128xf32>
    %cst_5 = arith.constant 0.000000e+00 : f32
    %6 = vector.broadcast %cst_5 : f32 to vector<8x128xf32>
    %7 = arith.maximumf %5, %6 : vector<8x128xf32>
    %c0_6 = arith.constant 0 : index
    %c0_7 = arith.constant 0 : index
    %8 = vector.load %arg4[%c0_6, %c0_7] : memref<128x128xf32, #tpu.memory_space<vmem>>, vector<128x128xf32>
    %c0_8 = arith.constant 0 : index
    %c0_9 = arith.constant 0 : index
    %9 = vector.load %arg5[%c0_8, %c0_9] : memref<1x128xf32, #tpu.memory_space<vmem>>, vector<1x128xf32>
    %cst_10 = arith.constant dense<0.000000e+00> : vector<8x128xf32>
    %10 = tpu.matmul %7, %8, %cst_10 {dimension_numbers = #tpu.dot_dimension_numbers<[1], [0], [0], [1], [0, 0, 1, 1], [], []>} : vector<8x128xf32>, vector<128x128xf32>, vector<8x128xf32> -> vector<8x128xf32>
    %11 = vector.broadcast %9 : vector<1x128xf32> to vector<8x128xf32>
    %12 = arith.addf %10, %11 : vector<8x128xf32>
    %cst_11 = arith.constant 0.000000e+00 : f32
    %13 = vector.broadcast %cst_11 : f32 to vector<8x128xf32>
    %14 = arith.maximumf %12, %13 : vector<8x128xf32>
    %c0_12 = arith.constant 0 : index
    %c0_13 = arith.constant 0 : index
    %15 = vector.load %arg6[%c0_12, %c0_13] : memref<8x128xf32, #tpu.memory_space<vmem>>, vector<8x128xf32>
    tpu.vector_store %arg6[%c0_12, %c0_13], %14 {strides = array<i32>} : memref<8x128xf32, #tpu.memory_space<vmem>>, vector<8x128xf32>,
    return
  }
  func.func @transform_0(%arg0: i32) -> (i32, i32) {
    %c0_i32 = arith.constant 0 : i32
    %c0_i32_0 = arith.constant 0 : i32
    return %arg0, %c0_i32 : i32, i32
  }
  func.func @transform_1(%arg0: i32) -> (i32, i32) {
    %c0_i32 = arith.constant 0 : i32
    %c0_i32_0 = arith.constant 0 : i32
    %c0_i32_1 = arith.constant 0 : i32
    return %c0_i32, %c0_i32_0 : i32, i32
  }
  func.func @transform_2(%arg0: i32) -> (i32, i32) {
    %c0_i32 = arith.constant 0 : i32
    %c0_i32_0 = arith.constant 0 : i32
    %c0_i32_1 = arith.constant 0 : i32
    return %c0_i32, %c0_i32_0 : i32, i32
  }
  func.func @transform_3(%arg0: i32) -> (i32, i32) {
    %c0_i32 = arith.constant 0 : i32
    %c0_i32_0 = arith.constant 0 : i32
    %c0_i32_1 = arith.constant 0 : i32
    return %c0_i32, %c0_i32_0 : i32, i32
  }
  func.func @transform_4(%arg0: i32) -> (i32, i32) {
    %c0_i32 = arith.constant 0 : i32
    %c0_i32_0 = arith.constant 0 : i32
    %c0_i32_1 = arith.constant 0 : i32
    return %c0_i32, %c0_i32_0 : i32, i32
  }
  func.func @transform_5(%arg0: i32) -> (i32, i32) {
    %c0_i32 = arith.constant 0 : i32
    %c0_i32_0 = arith.constant 0 : i32
    return %arg0, %c0_i32 : i32, i32
  }
}

</mosaic_0001>

<llo_original>
// kernel: dnn_forward.1
$region0: #{dnn_forward.1}
  #allocation0 [shape = 'u32[]', space=smem, size = 0x4, offset = 0x4, fixed_abs, tag = 'smem constant byte address 0x4 - core index']
  #allocation1 [shape = 'u32[72,128]{1,0:T(1,128)}', space=vmem, size = 0x9000, scoped, tag = 'internal scratch']
  %s0 = inlined_call_operand.vmem [shape: f32[8,128], index: 0, kind: input, shape index: {}]
  %s1 = inlined_call_operand.hbm [shape: f32[128,128], index: 1, kind: input, shape index: {}]
  %s2 = inlined_call_operand.vmem [shape: f32[1,128], index: 2, kind: input, shape index: {}]
  %s3 = inlined_call_operand.hbm [shape: f32[128,128], index: 3, kind: input, shape index: {}]
  %s4 = inlined_call_operand.vmem [shape: f32[1,128], index: 4, kind: input, shape index: {}]
  %s5 = inlined_call_operand.hbm [shape: f32[8,128], index: 5, kind: output, shape index: {}]
  %s6 = sld [smem:[#allocation0]]
  $region38: #{dnn_forward.1} parent=0
    _
  %s8 = ssub.s32 1, %s6
  %s9 = scalar_select 0, %s8, %s6
  $region1: #{dnn_forward.1} parent=0
    #allocation2 [shape = 'u8[65536]{0}', space=vmem, size = 0x10000, scoped, tag = 'input window, operand 1, single buffered']
    #allocation3 [shape = 's32[1]{0}', space=sflag, size = 0x4, scoped, tag = 'scoped memory for dnn_forward.1']
    #allocation4 [shape = 's32[1]{0}', space=sflag, size = 0x4, scoped, tag = 'scoped memory for dnn_forward.1']
    #allocation5 [shape = 'u8[65536]{0}', space=vmem, size = 0x10000, scoped, tag = 'input window, operand 3, single buffered']
    #allocation6 [shape = 's32[1]{0}', space=sflag, size = 0x4, scoped, tag = 'scoped memory for dnn_forward.1']
    #allocation7 [shape = 'u8[4096]{0}', space=vmem, size = 0x1000, scoped, tag = 'output window, operand 0, single buffered']
    %10 = vsyncpa [#allocation3], 0
    %11 = vsyncpa [#allocation6], 0
    %12 = vsyncpa [#allocation4], 0
    // Predicated region
    $region2: #{dnn_forward.1} parent=1 // pred_check
      _
    $region3: #{dnn_forward.1} parent=1 // pred_check_branch
      %14 = sbr.rel (0) target = $region5
    $region4: #{dnn_forward.1} parent=1 // pred_region
      _
    $region5: #{dnn_forward.1} parent=1 // pred_fallthru
      _
    // Predicated region
    $region6: #{dnn_forward.1} parent=1 // pred_check
      _
    $region7: #{dnn_forward.1} parent=1 // pred_check_branch
      %16 = sbr.rel (0) target = $region9
    $region8: #{dnn_forward.1} parent=1 // pred_region
      %18 = vsyncadd [#allocation3], 0
      %s19 = sshll.u32 %s1, 4
      %s20 = int_to_ptr.hbm [resolvable:$true] %s19
      %s21 = sshll.u32 [#allocation2], 4
      %s22 = int_to_ptr.vmem [resolvable:$true] %s21
      %27 = dma.hbm_to_vmem [thread:$0]  %s20, 2048, %s22, [#allocation3], 128, 128, 8
    $region9: #{dnn_forward.1} parent=1 // pred_fallthru
      _
    // Predicated region
    $region10: #{dnn_forward.1} parent=1 // pred_check
      _
    $region11: #{dnn_forward.1} parent=1 // pred_check_branch
      %29 = sbr.rel (0) target = $region13
    $region12: #{dnn_forward.1} parent=1 // pred_region
      _
    $region13: #{dnn_forward.1} parent=1 // pred_fallthru
      _
    // Predicated region
    $region14: #{dnn_forward.1} parent=1 // pred_check
      _
    $region15: #{dnn_forward.1} parent=1 // pred_check_branch
      %31 = sbr.rel (0) target = $region17
    $region16: #{dnn_forward.1} parent=1 // pred_region
      %33 = vsyncadd [#allocation6], 0
      %s34 = sshll.u32 %s3, 4
      %s35 = int_to_ptr.hbm [resolvable:$true] %s34
      %s36 = sshll.u32 [#allocation5], 4
      %s37 = int_to_ptr.vmem [resolvable:$true] %s36
      %42 = dma.hbm_to_vmem [thread:$0]  %s35, 2048, %s37, [#allocation6], 128, 128, 8
    $region17: #{dnn_forward.1} parent=1 // pred_fallthru
      _
    // Predicated region
    $region18: #{dnn_forward.1} parent=1 // pred_check
      _
    $region19: #{dnn_forward.1} parent=1 // pred_check_branch
      %44 = sbr.rel (0) target = $region21
    $region20: #{dnn_forward.1} parent=1 // pred_region
      _
    $region21: #{dnn_forward.1} parent=1 // pred_fallthru
      _
    // Predicated region
    $region22: #{dnn_forward.1} parent=1 // pred_check
      _
    $region23: #{dnn_forward.1} parent=1 // pred_check_branch
      %46 = sbr.rel (0) target = $region25
    $region24: #{dnn_forward.1} parent=1 // pred_region
      %48 = dma.done [#allocation3], 2048
    $region25: #{dnn_forward.1} parent=1 // pred_fallthru
      _
    // Predicated region
    $region26: #{dnn_forward.1} parent=1 // pred_check
      _
    $region27: #{dnn_forward.1} parent=1 // pred_check_branch
      %50 = sbr.rel (0) target = $region29
    $region28: #{dnn_forward.1} parent=1 // pred_region
      %52 = dma.done [#allocation6], 2048
    $region29: #{dnn_forward.1} parent=1 // pred_fallthru
      _
    %v53 = vld [vmem:[%s0] sm:$0xff]
    %v54 = vld [vmem:[#allocation2] sm:$0xff]
    %v55 = vld [vmem:[#allocation2 + $0x8] sm:$0xff]
    %v56 = vld [vmem:[#allocation2 + $0x10] sm:$0xff]
    %v57 = vld [vmem:[#allocation2 + $0x18] sm:$0xff]
    %v58 = vld [vmem:[#allocation2 + $0x20] sm:$0xff]
    %v59 = vld [vmem:[#allocation2 + $0x28] sm:$0xff]
    %v60 = vld [vmem:[#allocation2 + $0x30] sm:$0xff]
    %v61 = vld [vmem:[#allocation2 + $0x38] sm:$0xff]
    %v62 = vld [vmem:[#allocation2 + $0x40] sm:$0xff]
    %v63 = vld [vmem:[#allocation2 + $0x48] sm:$0xff]
    %v64 = vld [vmem:[#allocation2 + $0x50] sm:$0xff]
    %v65 = vld [vmem:[#allocation2 + $0x58] sm:$0xff]
    %v66 = vld [vmem:[#allocation2 + $0x60] sm:$0xff]
    %v67 = vld [vmem:[#allocation2 + $0x68] sm:$0xff]
    %v68 = vld [vmem:[#allocation2 + $0x70] sm:$0xff]
    %v69 = vld [vmem:[#allocation2 + $0x78] sm:$0xff]
    %v70 = vld [vmem:[%s2] sm:$0x1]
    %v72 = vperm.slane %v70, 0
    %74 = vmatpush.msra.mxu0 %v69
    %75 = vmatpush.msra.mxu0 %v68
    %76 = vmatpush.msra.mxu0 %v67
    %77 = vmatpush.msra.mxu0 %v66
    %78 = vmatpush.msra.mxu0 %v65
    %79 = vmatpush.msra.mxu0 %v64
    %80 = vmatpush.msra.mxu0 %v63
    %81 = vmatpush.msra.mxu0 %v62
    %82 = vmatpush.msra.mxu0 %v61
    %83 = vmatpush.msra.mxu0 %v60
    %84 = vmatpush.msra.mxu0 %v59
    %85 = vmatpush.msra.mxu0 %v58
    %86 = vmatpush.msra.mxu0 %v57
    %87 = vmatpush.msra.mxu0 %v56
    %88 = vmatpush.msra.mxu0 %v55
    %89 = vmatpush.msra.mxu0 %v54
    %90 = vmatmul.f32.gmra.mxu0 %v53
    %v91 = vpop.f32.mrf.mxu0
    %v92 = vadd.f32 %v72, %v91
    %93 = vdwg.mxu0
    %v94 = vmax.f32 %v92, 0.0
    %v95 = vld [vmem:[#allocation5] sm:$0xff]
    %v96 = vld [vmem:[#allocation5 + $0x8] sm:$0xff]
    %v97 = vld [vmem:[#allocation5 + $0x10] sm:$0xff]
    %v98 = vld [vmem:[#allocation5 + $0x18] sm:$0xff]
    %v99 = vld [vmem:[#allocation5 + $0x20] sm:$0xff]
    %v100 = vld [vmem:[#allocation5 + $0x28] sm:$0xff]
    %v101 = vld [vmem:[#allocation5 + $0x30] sm:$0xff]
    %v102 = vld [vmem:[#allocation5 + $0x38] sm:$0xff]
    %v103 = vld [vmem:[#allocation5 + $0x40] sm:$0xff]
    %v104 = vld [vmem:[#allocation5 + $0x48] sm:$0xff]
    %v105 = vld [vmem:[#allocation5 + $0x50] sm:$0xff]
    %v106 = vld [vmem:[#allocation5 + $0x58] sm:$0xff]
    %v107 = vld [vmem:[#allocation5 + $0x60] sm:$0xff]
    %v108 = vld [vmem:[#allocation5 + $0x68] sm:$0xff]
    %v109 = vld [vmem:[#allocation5 + $0x70] sm:$0xff]
    %v110 = vld [vmem:[#allocation5 + $0x78] sm:$0xff]
    %v111 = vld [vmem:[%s4] sm:$0x1]
    %v113 = vperm.slane %v111, 0
    %115 = vmatpush.msra.mxu0 %v110
    %116 = vmatpush.msra.mxu0 %v109
    %117 = vmatpush.msra.mxu0 %v108
    %118 = vmatpush.msra.mxu0 %v107
    %119 = vmatpush.msra.mxu0 %v106
    %120 = vmatpush.msra.mxu0 %v105
    %121 = vmatpush.msra.mxu0 %v104
    %122 = vmatpush.msra.mxu0 %v103
    %123 = vmatpush.msra.mxu0 %v102
    %124 = vmatpush.msra.mxu0 %v101
    %125 = vmatpush.msra.mxu0 %v100
    %126 = vmatpush.msra.mxu0 %v99
    %127 = vmatpush.msra.mxu0 %v98
    %128 = vmatpush.msra.mxu0 %v97
    %129 = vmatpush.msra.mxu0 %v96
    %130 = vmatpush.msra.mxu0 %v95
    %131 = vmatmul.f32.gmra.mxu0 %v94
    %v132 = vpop.f32.mrf.mxu0
    %v133 = vadd.f32 %v113, %v132
    %134 = vdwg.mxu0
    %v135 = vmax.f32 %v133, 0.0
    %136 = vst [vmem:[#allocation7] sm:$0xff] %v135
    // Predicated region
    $region30: #{dnn_forward.1} parent=1 // pred_check
      _
    $region31: #{dnn_forward.1} parent=1 // pred_check_branch
      %138 = sbr.rel (0) target = $region33
    $region32: #{dnn_forward.1} parent=1 // pred_region
      %140 = vsyncadd [#allocation4], 0
      %s142 = sshll.u32 [#allocation7], 4
      %s143 = int_to_ptr.vmem [resolvable:$true] %s142
      %s144 = sshll.u32 %s5, 4
      %s145 = int_to_ptr.hbm [resolvable:$true] %s144
      %147 = dma.vmem_to_hbm [thread:$0]  %s143, 128, %s145, [#allocation4]
    $region33: #{dnn_forward.1} parent=1 // pred_fallthru
      _
    // Predicated region
    $region34: #{dnn_forward.1} parent=1 // pred_check
      _
    $region35: #{dnn_forward.1} parent=1 // pred_check_branch
      %149 = sbr.rel (0) target = $region37
    $region36: #{dnn_forward.1} parent=1 // pred_region
      %151 = dma.done [#allocation4], 128
    $region37: #{dnn_forward.1} parent=1 // pred_fallthru
      _
    %152 = vsyncpa [#allocation3], 1
    %153 = vsyncpa [#allocation6], 1
    %154 = vsyncpa [#allocation4], 1

</llo_original>
